<compile_context>
chip_gen: v5e
topology: v5e:2x2
jax: 0.10.0
libtpu: 0.0.40
codegen_flags: <defaults>
</compile_context>

<pallas_src>
import jax
import jax.numpy as jnp
from jax.experimental import pallas as pl
from jax.experimental.pallas import tpu as pltpu


def _conv_stats_kernel(x_ref, w_ref, conv_ref, sum_ref, sumsq_ref):
    """Pass 1: 3x3 conv (3 banded MXU matmuls) + per-image BN partial stats.

    x_ref:     (1, H+2, (W+2)*Cin)    bf16, spatially padded, (W,Cin) packed on lanes
    w_ref:     (3, (W+2)*Cin, W*Cout) bf16, banded conv weights (one band per kh)
    conv_ref:  (1, H, W*Cout)         f32, lane-dense packed conv output
    sum_ref:   (1, 1, W*Cout)         f32, per-lane sum          (BN partial)
    sumsq_ref: (1, 1, W*Cout)         f32, per-lane sum of squares (BN partial)
    """
    H = x_ref.shape[1] - 2
    WC = conv_ref.shape[-1]

    acc = jnp.zeros((H, WC), jnp.float32)
    for kh in range(3):  # static unroll: 3 matmuls, K=(W+2)*Cin, N=W*Cout (lane-dense)
        a = x_ref[0, kh:kh + H, :]        # contiguous sublane row-window, no relayout
        acc = acc + jax.lax.dot_general(
            a, w_ref[kh],
            dimension_numbers=(((1,), (0,)), ((), ())),
            preferred_element_type=jnp.float32)

    conv_ref[0] = acc
    sum_ref[0] = jnp.sum(acc, axis=0, keepdims=True)
    sumsq_ref[0] = jnp.sum(acc * acc, axis=0, keepdims=True)


def _normalize_kernel(conv_ref, scale_ref, shift_ref, o_ref):
    """Pass 2: y = conv * scale + shift  (one lane-dense FMA over the slab)."""
    o_ref[0] = conv_ref[0] * scale_ref[...] + shift_ref[...]


def _banded_weights(w_oihw, W):
    """Pack OIHW 3x3 weights into 3 banded ((W+2)*Cin, W*Cout) matrices.

    B[kh, (w+kw)*Cin + c, w*Cout + o] = w_oihw[o, c, kh, kw], so that
    (H, (W+2)*Cin) @ B[kh] computes the kh-row tap of the conv for every
    (w, cout) output lane at once.
    """
    Cout, Cin, _, _ = w_oihw.shape
    w_hwio = jnp.transpose(w_oihw, (2, 3, 1, 0)).astype(jnp.float32)  # (3,3,Cin,Cout)
    eye = jnp.eye(W, dtype=jnp.float32)
    bands = []
    for kh in range(3):
        b = jnp.zeros(((W + 2) * Cin, W * Cout), jnp.float32)
        for kw in range(3):
            blockdiag = jnp.kron(eye, w_hwio[kh, kw])                 # (W*Cin, W*Cout)
            b = b + jnp.pad(blockdiag, ((kw * Cin, (2 - kw) * Cin), (0, 0)))
        bands.append(b)
    return jnp.stack(bands)                                           # (3,(W+2)*Cin,W*Cout)


def conv_block_forward(x_nchw, w_oihw, conv_bias, bn_gamma, bn_beta, eps=1e-5):
    """PyTorch-equivalent ConvBlock forward (Conv2d 3x3 'same' + BatchNorm2d, train mode).

    Input/output are NCHW float32.  `conv_bias` is accepted for API parity but not
    used: a per-channel constant added before training-mode BN is exactly cancelled
    by the batch-mean subtraction, so the forward output is unchanged.
    """
    del conv_bias
    N, Cin, H, W = x_nchw.shape
    Cout = w_oihw.shape[0]
    WC = W * Cout
    Kdim = (W + 2) * Cin

    # ---- wrapper-side layout glue (transposes / padding / weight packing only) ----
    x_nhwc = jnp.transpose(x_nchw, (0, 2, 3, 1))
    x_pad = jnp.pad(x_nhwc, ((0, 0), (1, 1), (1, 1), (0, 0)))
    x2d = x_pad.reshape(N, H + 2, Kdim).astype(jnp.bfloat16)      # bf16 matmul input
    w_banded = _banded_weights(w_oihw, W).astype(jnp.bfloat16)

    cparams = pltpu.CompilerParams(
        dimension_semantics=("parallel",),           # both TensorCores on v7x
        vmem_limit_bytes=32 * 1024 * 1024)           # safe on v5e / v6e / v7x

    # ---- pass 1: conv + per-image BN partial statistics ---------------------------
    conv, psum, psumsq = pl.pallas_call(
        _conv_stats_kernel,
        out_shape=(jax.ShapeDtypeStruct((N, H, WC), jnp.float32),
                   jax.ShapeDtypeStruct((N, 1, WC), jnp.float32),
                   jax.ShapeDtypeStruct((N, 1, WC), jnp.float32)),
        grid=(N,),
        in_specs=[pl.BlockSpec((1, H + 2, Kdim), lambda n: (n, 0, 0)),
                  pl.BlockSpec((3, Kdim, WC), lambda n: (0, 0, 0))],
        out_specs=(pl.BlockSpec((1, H, WC), lambda n: (n, 0, 0)),
                   pl.BlockSpec((1, 1, WC), lambda n: (n, 0, 0)),
                   pl.BlockSpec((1, 1, WC), lambda n: (n, 0, 0))),
        compiler_params=cparams,
    )(x2d, w_banded)

    # ---- tiny per-channel BN math in JAX (kept in f32) ----------------------------
    cnt = float(N * H * W)
    ch_sum = psum[:, 0, :].sum(axis=0).reshape(W, Cout).sum(axis=0)       # (Cout,)
    ch_sumsq = psumsq[:, 0, :].sum(axis=0).reshape(W, Cout).sum(axis=0)   # (Cout,)
    mean = ch_sum / cnt
    var = ch_sumsq / cnt - mean * mean          # biased variance (PyTorch BN forward)
    scale = bn_gamma * jax.lax.rsqrt(var + eps)
    shift = bn_beta - mean * scale
    scale_packed = jnp.tile(scale, (W,)).reshape(1, WC).astype(jnp.float32)
    shift_packed = jnp.tile(shift, (W,)).reshape(1, WC).astype(jnp.float32)
    # TODO(synk): BatchNorm running_mean/running_var buffer updates (training-time
    # side effect) are not reproduced; only the forward output is.

    # ---- pass 2: normalize (single FMA over the lane-dense slab) ------------------
    y_packed = pl.pallas_call(
        _normalize_kernel,
        out_shape=jax.ShapeDtypeStruct((N, H, WC), jnp.float32),
        grid=(N,),
        in_specs=[pl.BlockSpec((1, H, WC), lambda n: (n, 0, 0)),
                  pl.BlockSpec((1, WC), lambda n: (0, 0)),
                  pl.BlockSpec((1, WC), lambda n: (0, 0))],
        out_specs=pl.BlockSpec((1, H, WC), lambda n: (n, 0, 0)),
        compiler_params=cparams,
    )(conv, scale_packed, shift_packed)

    out_nhwc = y_packed.reshape(N, H, W, Cout)
    return jnp.transpose(out_nhwc, (0, 3, 1, 2)).astype(x_nchw.dtype)    # back to NCHW


def _reference_forward(x_nchw, w_oihw, conv_bias, bn_gamma, bn_beta, eps=1e-5):
    """Pure-JAX reference (lax conv + batch-stat BN), for correctness check."""
    conv = jax.lax.conv_general_dilated(
        x_nchw, w_oihw, window_strides=(1, 1), padding="SAME",
        dimension_numbers=("NCHW", "OIHW", "NCHW"))
    conv = conv + conv_bias[None, :, None, None]
    mean = conv.mean(axis=(0, 2, 3), keepdims=True)
    var = conv.var(axis=(0, 2, 3), keepdims=True)       # biased, like PyTorch BN fwd
    xhat = (conv - mean) / jnp.sqrt(var + eps)
    return bn_gamma[None, :, None, None] * xhat + bn_beta[None, :, None, None]


if __name__ == "__main__":
    N, Cin, Cout, H, W = 2, 4, 8, 16, 16

    key = jax.random.PRNGKey(0)
    kx, kw, kb, kg, kbeta = jax.random.split(key, 5)

    x = jax.random.normal(kx, (N, Cin, H, W), dtype=jnp.float32)
    conv_w = 0.1 * jax.random.normal(kw, (Cout, Cin, 3, 3), dtype=jnp.float32)
    conv_b = 0.1 * jax.random.normal(kb, (Cout,), dtype=jnp.float32)
    bn_gamma = 1.0 + 0.1 * jax.random.normal(kg, (Cout,), dtype=jnp.float32)
    bn_beta = 0.1 * jax.random.normal(kbeta, (Cout,), dtype=jnp.float32)

    out = conv_block_forward(x, conv_w, conv_b, bn_gamma, bn_beta)
    out = jax.block_until_ready(out)

    ref = _reference_forward(x, conv_w, conv_b, bn_gamma, bn_beta)
    assert out.shape == (N, Cout, H, W)
    # Tolerance reflects bf16 matmul inputs (f32 accumulate / f32 BN statistics).
    assert jnp.allclose(out, ref, atol=2e-2, rtol=2e-2), "mismatch vs reference"

    print("KERNEL_OK")
</pallas_src>

<mosaic_0001>
module attributes {stable_mosaic.version = 11 : i64} {
  func.func @_conv_stats_kernel(%arg0: i32, %arg1: memref<1x18x72xbf16, #tpu.memory_space<vmem>>, %arg2: memref<3x72x128xbf16, #tpu.memory_space<vmem>>, %arg3: memref<1x16x128xf32, #tpu.memory_space<vmem>>, %arg4: memref<1x1x128xf32, #tpu.memory_space<vmem>>, %arg5: memref<1x1x128xf32, #tpu.memory_space<vmem>>) attributes {dimension_semantics = [#tpu.dimension_semantics<parallel>], iteration_bounds = array<i64: 2>, scalar_prefetch = 0 : i64, scratch_operands = 0 : i64, tpu.core_type = #tpu.core_type<tc>, window_params = [{transform_indices = @transform_0, window_bounds = array<i64: 1, 18, 72>}, {pipeline_mode = #tpu.pipeline_mode<synchronous>, transform_indices = @transform_1, window_bounds = array<i64: 3, 72, 128>}, {transform_indices = @transform_2, window_bounds = array<i64: 1, 16, 128>}, {transform_indices = @transform_3, window_bounds = array<i64: 1, 1, 128>}, {transform_indices = @transform_4, window_bounds = array<i64: 1, 1, 128>}]} {
    %cst = arith.constant 0.000000e+00 : f32
    %0 = vector.broadcast %cst : f32 to vector<16x128xf32>
    %c0 = arith.constant 0 : index
    %c0_0 = arith.constant 0 : index
    %c0_1 = arith.constant 0 : index
    %1 = vector.load %arg1[%c0, %c0_0, %c0_1] : memref<1x18x72xbf16, #tpu.memory_space<vmem>>, vector<1x16x72xbf16>
    %2 = vector.shape_cast %1 : vector<1x16x72xbf16> to vector<16x72xbf16>
    %c0_2 = arith.constant 0 : index
    %c0_3 = arith.constant 0 : index
    %c0_4 = arith.constant 0 : index
    %3 = vector.load %arg2[%c0_2, %c0_3, %c0_4] : memref<3x72x128xbf16, #tpu.memory_space<vmem>>, vector<1x72x128xbf16>
    %4 = vector.shape_cast %3 : vector<1x72x128xbf16> to vector<72x128xbf16>
    %cst_5 = arith.constant dense<0.000000e+00> : vector<16x128xf32>
    %5 = tpu.matmul %2, %4, %cst_5 {dimension_numbers = #tpu.dot_dimension_numbers<[1], [0], [0], [1], [0, 0, 1, 1], [], []>} : vector<16x72xbf16>, vector<72x128xbf16>, vector<16x128xf32> -> vector<16x128xf32>
    %6 = arith.addf %0, %5 : vector<16x128xf32>
    %c0_6 = arith.constant 0 : index
    %c1 = arith.constant 1 : index
    %c0_7 = arith.constant 0 : index
    %7 = vector.load %arg1[%c0_6, %c1, %c0_7] : memref<1x18x72xbf16, #tpu.memory_space<vmem>>, vector<1x16x72xbf16>
    %8 = vector.shape_cast %7 : vector<1x16x72xbf16> to vector<16x72xbf16>
    %c1_8 = arith.constant 1 : index
    %c0_9 = arith.constant 0 : index
    %c0_10 = arith.constant 0 : index
    %9 = vector.load %arg2[%c1_8, %c0_9, %c0_10] : memref<3x72x128xbf16, #tpu.memory_space<vmem>>, vector<1x72x128xbf16>
    %10 = vector.shape_cast %9 : vector<1x72x128xbf16> to vector<72x128xbf16>
    %cst_11 = arith.constant dense<0.000000e+00> : vector<16x128xf32>
    %11 = tpu.matmul %8, %10, %cst_11 {dimension_numbers = #tpu.dot_dimension_numbers<[1], [0], [0], [1], [0, 0, 1, 1], [], []>} : vector<16x72xbf16>, vector<72x128xbf16>, vector<16x128xf32> -> vector<16x128xf32>
    %12 = arith.addf %6, %11 : vector<16x128xf32>
    %c0_12 = arith.constant 0 : index
    %c2 = arith.constant 2 : index
    %c0_13 = arith.constant 0 : index
    %13 = vector.load %arg1[%c0_12, %c2, %c0_13] : memref<1x18x72xbf16, #tpu.memory_space<vmem>>, vector<1x16x72xbf16>
    %14 = vector.shape_cast %13 : vector<1x16x72xbf16> to vector<16x72xbf16>
    %c2_14 = arith.constant 2 : index
    %c0_15 = arith.constant 0 : index
    %c0_16 = arith.constant 0 : index
    %15 = vector.load %arg2[%c2_14, %c0_15, %c0_16] : memref<3x72x128xbf16, #tpu.memory_space<vmem>>, vector<1x72x128xbf16>
    %16 = vector.shape_cast %15 : vector<1x72x128xbf16> to vector<72x128xbf16>
    %cst_17 = arith.constant dense<0.000000e+00> : vector<16x128xf32>
    %17 = tpu.matmul %14, %16, %cst_17 {dimension_numbers = #tpu.dot_dimension_numbers<[1], [0], [0], [1], [0, 0, 1, 1], [], []>} : vector<16x72xbf16>, vector<72x128xbf16>, vector<16x128xf32> -> vector<16x128xf32>
    %18 = arith.addf %12, %17 : vector<16x128xf32>
    %c0_18 = arith.constant 0 : index
    %c0_19 = arith.constant 0 : index
    %c0_20 = arith.constant 0 : index
    %19 = vector.load %arg3[%c0_18, %c0_19, %c0_20] : memref<1x16x128xf32, #tpu.memory_space<vmem>>, vector<1x16x128xf32>
    %20 = vector.shape_cast %19 : vector<1x16x128xf32> to vector<16x128xf32>
    %21 = vector.shape_cast %18 : vector<16x128xf32> to vector<1x16x128xf32>
    tpu.vector_store %arg3[%c0_18, %c0_19, %c0_20], %21 {strides = array<i32>} : memref<1x16x128xf32, #tpu.memory_space<vmem>>, vector<1x16x128xf32>,
    %cst_21 = arith.constant dense<0.000000e+00> : vector<128xf32>
    %22 = vector.multi_reduction <add>, %18, %cst_21 [0] : vector<16x128xf32> to vector<128xf32>
    %23 = vector.shape_cast %22 : vector<128xf32> to vector<1x128xf32>
    %c0_22 = arith.constant 0 : index
    %c0_23 = arith.constant 0 : index
    %c0_24 = arith.constant 0 : index
    %24 = vector.load %arg4[%c0_22, %c0_23, %c0_24] : memref<1x1x128xf32, #tpu.memory_space<vmem>>, vector<1x1x128xf32>
    %25 = vector.shape_cast %24 : vector<1x1x128xf32> to vector<1x128xf32>
    %26 = vector.shape_cast %23 : vector<1x128xf32> to vector<1x1x128xf32>
    tpu.vector_store %arg4[%c0_22, %c0_23, %c0_24], %26 {strides = array<i32>} : memref<1x1x128xf32, #tpu.memory_space<vmem>>, vector<1x1x128xf32>,
    %27 = arith.mulf %18, %18 : vector<16x128xf32>
    %cst_25 = arith.constant dense<0.000000e+00> : vector<128xf32>
    %28 = vector.multi_reduction <add>, %27, %cst_25 [0] : vector<16x128xf32> to vector<128xf32>
    %29 = vector.shape_cast %28 : vector<128xf32> to vector<1x128xf32>
    %c0_26 = arith.constant 0 : index
    %c0_27 = arith.constant 0 : index
    %c0_28 = arith.constant 0 : index
    %30 = vector.load %arg5[%c0_26, %c0_27, %c0_28] : memref<1x1x128xf32, #tpu.memory_space<vmem>>, vector<1x1x128xf32>
    %31 = vector.shape_cast %30 : vector<1x1x128xf32> to vector<1x128xf32>
    %32 = vector.shape_cast %29 : vector<1x128xf32> to vector<1x1x128xf32>
    tpu.vector_store %arg5[%c0_26, %c0_27, %c0_28], %32 {strides = array<i32>} : memref<1x1x128xf32, #tpu.memory_space<vmem>>, vector<1x1x128xf32>,
    return
  }
  func.func @transform_0(%arg0: i32) -> (i32, i32, i32) {
    %c0_i32 = arith.constant 0 : i32
    %c0_i32_0 = arith.constant 0 : i32
    %c0_i32_1 = arith.constant 0 : i32
    return %arg0, %c0_i32, %c0_i32_0 : i32, i32, i32
  }
  func.func @transform_1(%arg0: i32) -> (i32, i32, i32) {
    %c0_i32 = arith.constant 0 : i32
    %c0_i32_0 = arith.constant 0 : i32
    %c0_i32_1 = arith.constant 0 : i32
    %c0_i32_2 = arith.constant 0 : i32
    return %c0_i32, %c0_i32_0, %c0_i32_1 : i32, i32, i32
  }
  func.func @transform_2(%arg0: i32) -> (i32, i32, i32) {
    %c0_i32 = arith.constant 0 : i32
    %c0_i32_0 = arith.constant 0 : i32
    %c0_i32_1 = arith.constant 0 : i32
    return %arg0, %c0_i32, %c0_i32_0 : i32, i32, i32
  }
  func.func @transform_3(%arg0: i32) -> (i32, i32, i32) {
    %c0_i32 = arith.constant 0 : i32
    %c0_i32_0 = arith.constant 0 : i32
    %c0_i32_1 = arith.constant 0 : i32
    return %arg0, %c0_i32, %c0_i32_0 : i32, i32, i32
  }
  func.func @transform_4(%arg0: i32) -> (i32, i32, i32) {
    %c0_i32 = arith.constant 0 : i32
    %c0_i32_0 = arith.constant 0 : i32
    %c0_i32_1 = arith.constant 0 : i32
    return %arg0, %c0_i32, %c0_i32_0 : i32, i32, i32
  }
}

</mosaic_0001>

<llo_original>
// kernel: tpu_custom_call.1
$region0: #{tpu_custom_call.1}
  #allocation0 [shape = 'u32[]', space=smem, size = 0x4, offset = 0x4, fixed_abs, tag = 'smem constant byte address 0x4 - core index']
  #allocation1 [shape = 'u32[72,128]{1,0:T(1,128)}', space=vmem, size = 0x9000, scoped, tag = 'internal scratch']
  %s0 = inlined_call_operand.vmem [shape: bf16[2,18,72], index: 0, kind: input, shape index: {}]
  %s1 = inlined_call_operand.hbm [shape: bf16[3,72,128], index: 1, kind: input, shape index: {}]
  %s2 = inlined_call_operand.hbm [shape: f32[2,16,128], index: 2, kind: output, shape index: {0}]
  %s3 = inlined_call_operand.hbm [shape: f32[2,1,128], index: 3, kind: output, shape index: {1}]
  %s4 = inlined_call_operand.hbm [shape: f32[2,1,128], index: 4, kind: output, shape index: {2}]
  %5 = xla_tuple %s2, %s3, %s4
  %s6 = sld [smem:[#allocation0]]
  $region61: #{tpu_custom_call.1} parent=0
    _
  %s8 = ssub.s32 1, %s6
  %s9 = scalar_select 0, %s8, %s6
  $region1: #{tpu_custom_call.1} parent=0
    #allocation2 [shape = 'u8[55296]{0}', space=vmem, size = 0xd800, scoped, tag = 'input window, operand 1, single buffered']
    #allocation3 [shape = 's32[2]{0}', space=sflag, size = 0x8, scoped, tag = 'scoped memory for tpu_custom_call.1']
    #allocation4 [shape = 's32[2]{0}', space=sflag, size = 0x8, scoped, tag = 'scoped memory for tpu_custom_call.1']
    #allocation5 [shape = 'u8[16384]{0}', space=vmem, size = 0x4000, scoped, tag = 'output window, operand 0']
    #allocation6 [shape = 'u8[1024]{0}', space=vmem, size = 0x400, scoped, tag = 'output window, operand 1']
    #allocation7 [shape = 's32[2]{0}', space=sflag, size = 0x8, scoped, tag = 'scoped memory for tpu_custom_call.1']
    #allocation8 [shape = 'u8[1024]{0}', space=vmem, size = 0x400, scoped, tag = 'output window, operand 2']
    %10 = vsyncpa [#allocation3], 0
    %11 = vsyncpa [#allocation4], 0
    %s12 = scalar_lea.sflag [#allocation4], 1
    %13 = vsyncpa %s12, 0
    %14 = vsyncpa [#allocation7], 0
    %s15 = scalar_lea.sflag [#allocation7], 1
    %16 = vsyncpa %s15, 0
    loop: start=0, step=1, limit=4
    $region2: #{tpu_custom_call.1} parent=1 // loop_pre_header
      _
    $region3: #{tpu_custom_call.1} parent=1 // loop_header
      %s18 = sphi 0, %s22
      %p19 = scmp.ge.s32.totalorder %s18, 4
      %s28 = sphi 0, %s30
      %s31 = sphi 0, %s28
      %s32 = sphi 0, %s31
      %s48 = sphi 0, %s32
      %s52 = sphi 0, %s52
      %s54 = sphi 0, %s52
      %s55 = sphi 0, %s54
      %s69 = sphi 0, %s55
      %s75 = sphi 0, %s77
      %s78 = sphi 0, %s75
      %s79 = sphi 0, %s78
      %s95 = sphi 0, %s79
      %s101 = sphi 0, %s103
      %s104 = sphi 0, %s101
      %s105 = sphi 0, %s104
      %s121 = sphi 0, %s105
      %s127 = sphi 0, %s129
      %s130 = sphi 0, %s127
      %s131 = sphi 0, %s130
      %s147 = sphi 0, %s131
    $region4: #{tpu_custom_call.1} parent=1 // loop_header_branch
      %21 = sbr.rel (%p19) target = $region8
    $region5: #{tpu_custom_call.1} parent=1 // loop_body
      %s23 = ssub.s32 %s18, 1
      %s24 = ssub.s32 %s18, 2
      %s25 = sadd.s32 %s18, 1
      %s26 = ssub.s32 %s18, %s25
      %p27 = scmp.eq.s32.totalorder %s26, 0
      %s29 = sadd.s32 %s28, 1
      %s30 = scalar_select %p27, %s28, %s29
      %p33 = pneg %p27
      %p34 = scmp.eq.s32.totalorder %s18, 1
      %p35 = por %p33, %p34
      %p36 = scmp.ne.s32.totalorder %s28, %s31
      %p37 = scmp.eq.s32.totalorder %s18, 0
      %p38 = por %p36, %p37
      %p39 = scmp.ne.s32.totalorder %s28, %s31
      %p40 = scmp.eq.s32.totalorder %s23, 1
      %p41 = por %p39, %p40
      %p42 = scmp.ne.s32.totalorder %s31, %s32
      %p43 = scmp.eq.s32.totalorder %s23, 0
      %p44 = por %p42, %p43
      %p45 = scmp.ne.s32.totalorder %s31, %s32
      %p46 = scmp.eq.s32.totalorder %s24, 1
      %p47 = por %p45, %p46
      %p49 = scmp.ne.s32.totalorder %s32, %s48
      %p50 = scmp.eq.s32.totalorder %s24, 0
      %p51 = por %p49, %p50
      %s53 = sadd.s32 %s52, 1
      %p56 = scmp.eq.s32.totalorder %s18, 1
      %p57 = scmp.ne.s32.totalorder %s52, %s54
      %p58 = scmp.eq.s32.totalorder %s18, 0
      %p59 = por %p57, %p58
      %p60 = scmp.ne.s32.totalorder %s52, %s54
      %p61 = scmp.eq.s32.totalorder %s23, 1
      %p62 = por %p60, %p61
      %p63 = scmp.ne.s32.totalorder %s54, %s55
      %p64 = scmp.eq.s32.totalorder %s23, 0
      %p65 = por %p63, %p64
      %p66 = scmp.ne.s32.totalorder %s54, %s55
      %p67 = scmp.eq.s32.totalorder %s24, 1
      %p68 = por %p66, %p67
      %p70 = scmp.ne.s32.totalorder %s55, %s69
      %p71 = scmp.eq.s32.totalorder %s24, 0
      %p72 = por %p70, %p71
      %s73 = ssub.s32 %s18, %s25
      %p74 = scmp.eq.s32.totalorder %s73, 0
      %s76 = sadd.s32 %s75, 1
      %s77 = scalar_select %p74, %s75, %s76
      %p80 = pneg %p74
      %p81 = scmp.eq.s32.totalorder %s18, 1
      %p82 = por %p80, %p81
      %p83 = scmp.ne.s32.totalorder %s75, %s78
      %p84 = scmp.eq.s32.totalorder %s18, 0
      %p85 = por %p83, %p84
      %p86 = scmp.ne.s32.totalorder %s75, %s78
      %p87 = scmp.eq.s32.totalorder %s23, 1
      %p88 = por %p86, %p87
      %p89 = scmp.ne.s32.totalorder %s78, %s79
      %p90 = scmp.eq.s32.totalorder %s23, 0
      %p91 = por %p89, %p90
      %p92 = scmp.ne.s32.totalorder %s78, %s79
      %p93 = scmp.eq.s32.totalorder %s24, 1
      %p94 = por %p92, %p93
      %p96 = scmp.ne.s32.totalorder %s79, %s95
      %p97 = scmp.eq.s32.totalorder %s24, 0
      %p98 = por %p96, %p97
      %s99 = ssub.s32 %s18, %s25
      %p100 = scmp.eq.s32.totalorder %s99, 0
      %s102 = sadd.s32 %s101, 1
      %s103 = scalar_select %p100, %s101, %s102
      %p106 = pneg %p100
      %p107 = scmp.eq.s32.totalorder %s18, 1
      %p108 = por %p106, %p107
      %p109 = scmp.ne.s32.totalorder %s101, %s104
      %p110 = scmp.eq.s32.totalorder %s18, 0
      %p111 = por %p109, %p110
      %p112 = scmp.ne.s32.totalorder %s101, %s104
      %p113 = scmp.eq.s32.totalorder %s23, 1
      %p114 = por %p112, %p113
      %p115 = scmp.ne.s32.totalorder %s104, %s105
      %p116 = scmp.eq.s32.totalorder %s23, 0
      %p117 = por %p115, %p116
      %p118 = scmp.ne.s32.totalorder %s104, %s105
      %p119 = scmp.eq.s32.totalorder %s24, 1
      %p120 = por %p118, %p119
      %p122 = scmp.ne.s32.totalorder %s105, %s121
      %p123 = scmp.eq.s32.totalorder %s24, 0
      %p124 = por %p122, %p123
      %s125 = ssub.s32 %s18, %s25
      %p126 = scmp.eq.s32.totalorder %s125, 0
      %s128 = sadd.s32 %s127, 1
      %s129 = scalar_select %p126, %s127, %s128
      %p132 = pneg %p126
      %p133 = scmp.eq.s32.totalorder %s18, 1
      %p134 = por %p132, %p133
      %p135 = scmp.ne.s32.totalorder %s127, %s130
      %p136 = scmp.eq.s32.totalorder %s18, 0
      %p137 = por %p135, %p136
      %p138 = scmp.ne.s32.totalorder %s127, %s130
      %p139 = scmp.eq.s32.totalorder %s23, 1
      %p140 = por %p138, %p139
      %p141 = scmp.ne.s32.totalorder %s130, %s131
      %p142 = scmp.eq.s32.totalorder %s23, 0
      %p143 = por %p141, %p142
      %p144 = scmp.ne.s32.totalorder %s130, %s131
      %p145 = scmp.eq.s32.totalorder %s24, 1
      %p146 = por %p144, %p145
      %p148 = scmp.ne.s32.totalorder %s131, %s147
      %p149 = scmp.eq.s32.totalorder %s24, 0
      %p150 = por %p148, %p149
      %p151 = scmp.le.s32.totalorder 1, %s18
      %p152 = scmp.lt.s32.totalorder %s18, 3
      %p153 = pnand %p151, %p152
      %p154 = pneg %p153
      // Predicated region
      $region9: #{tpu_custom_call.1} parent=5 // pred_check
        _
      $region10: #{tpu_custom_call.1} parent=5 // pred_check_branch
        %156 = sbr.rel (%p153) target = $region12
      $region11: #{tpu_custom_call.1} parent=5 // pred_region
        %s157 = ssub.s32 %s18, 1
        // Predicated region
        $region13: #{tpu_custom_call.1} parent=11 // pred_check
          %p158 = pneg %p65
        $region14: #{tpu_custom_call.1} parent=11 // pred_check_branch
          %160 = sbr.rel (%p158) target = $region16
        $region15: #{tpu_custom_call.1} parent=11 // pred_region
          %162 = vsyncadd [#allocation3], 0
          %s163 = sshll.u32 %s1, 4
          %s164 = int_to_ptr.hbm [resolvable:$true] %s163
          %s165 = sshll.u32 [#allocation2], 4
          %s166 = int_to_ptr.vmem [resolvable:$true] %s165
          %171 = dma.hbm_to_vmem [thread:$0]  %s164, 1728, %s166, [#allocation3], 64, 64, 4
        $region16: #{tpu_custom_call.1} parent=11 // pred_fallthru
          _
      $region12: #{tpu_custom_call.1} parent=5 // pred_fallthru
        _
      %p172 = scmp.lt.s32.totalorder %s18, 2
      // Predicated region
      $region17: #{tpu_custom_call.1} parent=5 // pred_check
        %p173 = pneg %p172
      $region18: #{tpu_custom_call.1} parent=5 // pred_check_branch
        %175 = sbr.rel (%p173) target = $region20
      $region19: #{tpu_custom_call.1} parent=5 // pred_region
        // Predicated region
        $region21: #{tpu_custom_call.1} parent=19 // pred_check
          %p176 = pneg %p38
        $region22: #{tpu_custom_call.1} parent=19 // pred_check_branch
          %178 = sbr.rel (%p176) target = $region24
        $region23: #{tpu_custom_call.1} parent=19 // pred_region
          %p179 = scmp.lt.s32.totalorder %s18, 1
          %s180 = scalar_select %p179, %s18, 1
          %s181 = smul.addr %s180, 3
          %s182 = smul.addr %s181, 4
          %s183 = scalar_lea.vmem %s0, %s182
        $region24: #{tpu_custom_call.1} parent=19 // pred_fallthru
          _
      $region20: #{tpu_custom_call.1} parent=5 // pred_fallthru
        _
      %p184 = scmp.le.s32.totalorder 1, %s18
      %p185 = scmp.lt.s32.totalorder %s18, 3
      %p186 = pnand %p184, %p185
      %p187 = pneg %p186
      // Predicated region
      $region25: #{tpu_custom_call.1} parent=5 // pred_check
        _
      $region26: #{tpu_custom_call.1} parent=5 // pred_check_branch
        %189 = sbr.rel (%p186) target = $region28
      $region27: #{tpu_custom_call.1} parent=5 // pred_region
        %s190 = ssub.s32 %s18, 1
        // Predicated region
        $region29: #{tpu_custom_call.1} parent=27 // pred_check
          %p191 = pneg %p65
        $region30: #{tpu_custom_call.1} parent=27 // pred_check_branch
          %193 = sbr.rel (%p191) target = $region32
        $region31: #{tpu_custom_call.1} parent=27 // pred_region
          %195 = dma.done [#allocation3], 1728
        $region32: #{tpu_custom_call.1} parent=27 // pred_fallthru
          _
        %p196 = scmp.lt.s32.totalorder %s23, 1
        %s197 = scalar_select %p196, %s23, 1
        %s198 = smul.addr %s197, 3
        %s199 = smul.addr %s198, 4
        %s200 = scalar_lea.vmem %s0, %s199
        %p201 = pneg %p44
        %p202 = pneg %p41
        %p203 = pneg %p65
        %p204 = pneg %p62
        %p205 = pneg %p91
        %p206 = pneg %p88
        %s207 = sand.u32 %s78, 1
        %s208 = scalar_lea.sflag [#allocation4], %s207
        %s209 = sand.u32 %s78, 1
        %s210 = smul.addr %s209, 16
        %s211 = scalar_lea.vmem [#allocation5], %s210
        %p212 = pneg %p117
        %p213 = pneg %p114
        %s214 = sand.u32 %s23, 1
        %s215 = scalar_lea.sflag [#allocation7], %s214
        %s216 = sand.u32 %s104, 1
        %s217 = scalar_lea.vmem [#allocation6], %s216
        %p218 = pneg %p143
        %p219 = pneg %p140
        %s220 = sand.u32 %s23, 1
        %s221 = scalar_lea.sflag [#allocation7], %s220
        %s222 = sand.u32 %s130, 1
        %s223 = scalar_lea.vmem [#allocation8], %s222
        %p224 = scmp.lt.s32.totalorder %s23, 1
        %s225 = scalar_select %p224, %s23, 1
        %s226 = smul.addr %s225, 3
        %s227 = smul.addr %s226, 4
        %s228 = scalar_lea.vmem %s0, %s227
        %v230 = vld [vmem:[%s228] sm:$0xf]
        %v231 = vld [vmem:[%s228 + $0x4] sm:$0xf]
        %v232 = vld [vmem:[#allocation2] sm:$0xf]
        %v233 = vld [vmem:[#allocation2 + $0x4] sm:$0xf]
        %v234 = vld [vmem:[#allocation2 + $0x8] sm:$0xf]
        %v235 = vld [vmem:[#allocation2 + $0xc] sm:$0xf]
        %v236 = vld [vmem:[#allocation2 + $0x10] sm:$0xf]
        %v237 = vld [vmem:[#allocation2 + $0x14] sm:$0xf]
        %v238 = vld [vmem:[#allocation2 + $0x18] sm:$0xf]
        %v239 = vld [vmem:[#allocation2 + $0x1c] sm:$0xf]
        %v240 = vld [vmem:[#allocation2 + $0x20] sm:$0xf]
        %v241 = vld [vmem:[%s228 + $0x8] sm:$0x1]
        %s242 = scalar_lea.vmem [#allocation2], 36
        %v243 = vld [vmem:[%s242] sm:$0xf]
        %v244 = vld [vmem:[%s242 + $0x4] sm:$0xf]
        %v245 = vld [vmem:[%s242 + $0x8] sm:$0xf]
        %v246 = vld [vmem:[%s242 + $0xc] sm:$0xf]
        %v247 = vld [vmem:[%s242 + $0x10] sm:$0xf]
        %v248 = vld [vmem:[%s242 + $0x14] sm:$0xf]
        %v249 = vld [vmem:[%s242 + $0x18] sm:$0xf]
        %v250 = vld [vmem:[%s242 + $0x1c] sm:$0xf]
        %v251 = vld [vmem:[%s242 + $0x20] sm:$0xf]
        %v255 = vunpack.c.l.b16 %v230
        %v256 = vunpack.c.l.b16 %v231
        %v257 = vunpack.c.l.b16 %v241
        %v258 = vpack.c.b16 %v256, %v255
        %v259 = vpack.c.b16 %v257, %v257
        %vm260 = vsmask.f32 7424
        %v262 = vshrl.u32 %v258, 16
        %v264 = vshll.u32 %v258, 16
        %v266 = vrot.slane %v264, 1
        %v267 = vor.u32 %v262, %v266
        %v269 = vshll.u32 %v259, 16
        %v271 = vrot.slane %v269, 1
        %v272 = vsel %vm260, %v267, %v271
        %v282 = vunpack.c.l.b16 %v243
        %v283 = vunpack.c.l.b16 %v244
        %v284 = vunpack.c.l.b16 %v245
        %v285 = vunpack.c.l.b16 %v246
        %v286 = vunpack.c.l.b16 %v247
        %v287 = vunpack.c.l.b16 %v248
        %v288 = vunpack.c.l.b16 %v249
        %v289 = vunpack.c.l.b16 %v250
        %v290 = vunpack.c.l.b16 %v251
        %v291 = vpack.c.b16 %v283, %v282
        %v292 = vpack.c.b16 %v285, %v284
        %v293 = vpack.c.b16 %v287, %v286
        %v294 = vpack.c.b16 %v289, %v288
        %v295 = vpack.c.b16 %v290, %v290
        %vm300 = vcmask 588800
        %v302 = vsel %vm300, %v272, 0
        %vm304 = vcmask 1043456
        %v306 = vsel %vm304, %v295, 0
        %308 = vmatpush.bf16.msra.mxu0 0
        %309 = vmatpush.bf16.msra.mxu0 0
        %310 = vmatpush.bf16.msra.mxu0 0
        %311 = vmatpush.bf16.msra.mxu0 %v306
        %312 = vmatpush.bf16.msra.mxu0 %v294
        %313 = vmatpush.bf16.msra.mxu0 %v293
        %314 = vmatpush.bf16.msra.mxu0 %v292
        %315 = vmatpush.bf16.msra.mxu0 %v291
        %316 = vmatmul.bf16.gmra.mxu0 %v302
        %v317 = vpop.f32.mrf.mxu0
        %v318 = vadd.f32 0.0, %v317
        %v319 = vpop.f32.mrf.mxu0
        %v320 = vadd.f32 0.0, %v319
        %321 = vdwg.mxu0
        %v331 = vunpack.c.l.b16 %v232
        %v332 = vunpack.c.l.b16 %v233
        %v333 = vunpack.c.l.b16 %v234
        %v334 = vunpack.c.l.b16 %v235
        %v335 = vunpack.c.l.b16 %v236
        %v336 = vunpack.c.l.b16 %v237
        %v337 = vunpack.c.l.b16 %v238
        %v338 = vunpack.c.l.b16 %v239
        %v339 = vunpack.c.l.b16 %v240
        %v340 = vpack.c.b16 %v332, %v331
        %v341 = vpack.c.b16 %v334, %v333
        %v342 = vpack.c.b16 %v336, %v335
        %v343 = vpack.c.b16 %v338, %v337
        %v344 = vpack.c.b16 %v339, %v339
        %v349 = vsel %vm300, %v258, 0
        %v352 = vsel %vm304, %v344, 0
        %354 = vmatpush.bf16.msra.mxu0 0
        %355 = vmatpush.bf16.msra.mxu0 0
        %356 = vmatpush.bf16.msra.mxu0 0
        %357 = vmatpush.bf16.msra.mxu0 %v352
        %358 = vmatpush.bf16.msra.mxu0 %v343
        %359 = vmatpush.bf16.msra.mxu0 %v342
        %360 = vmatpush.bf16.msra.mxu0 %v341
        %361 = vmatpush.bf16.msra.mxu0 %v340
        %362 = vmatmul.bf16.gmra.mxu0 %v349
        %v363 = vpop.f32.mrf.mxu0
        %v364 = vadd.f32 %v318, %v363
        %v365 = vpop.f32.mrf.mxu0
        %v366 = vadd.f32 %v320, %v365
        %367 = vdwg.mxu0
        %v368 = vld [vmem:[%s228] sm:$0xe]
        %s369 = scalar_lea.vmem [#allocation2], 72
        %v370 = vld [vmem:[%s369] sm:$0xf]
        %v371 = vld [vmem:[%s369 + $0x4] sm:$0xf]
        %v372 = vld [vmem:[%s369 + $0x8] sm:$0xf]
        %v373 = vld [vmem:[%s369 + $0xc] sm:$0xf]
        %v374 = vld [vmem:[%s369 + $0x10] sm:$0xf]
        %v375 = vld [vmem:[%s369 + $0x14] sm:$0xf]
        %v376 = vld [vmem:[%s369 + $0x18] sm:$0xf]
        %v377 = vld [vmem:[%s369 + $0x1c] sm:$0xf]
        %v378 = vld [vmem:[%s369 + $0x20] sm:$0xf]
        %v380 = vunpack.c.l.b16 %v368
        %v381 = vpack.c.b16 %v256, %v380
        %vm382 = vcmask 1046528
        %v383 = vrot.slane %v381, 1
        %v384 = vrot.slane %v259, 1
        %v385 = vsel %vm382, %v383, %v384
        %v395 = vunpack.c.l.b16 %v370
        %v396 = vunpack.c.l.b16 %v371
        %v397 = vunpack.c.l.b16 %v372
        %v398 = vunpack.c.l.b16 %v373
        %v399 = vunpack.c.l.b16 %v374
        %v400 = vunpack.c.l.b16 %v375
        %v401 = vunpack.c.l.b16 %v376
        %v402 = vunpack.c.l.b16 %v377
        %v403 = vunpack.c.l.b16 %v378
        %v404 = vpack.c.b16 %v396, %v395
        %v405 = vpack.c.b16 %v398, %v397
        %v406 = vpack.c.b16 %v400, %v399
        %v407 = vpack.c.b16 %v402, %v401
        %v408 = vpack.c.b16 %v403, %v403
        %v414 = vsel %vm300, %v385, 0
        %v417 = vsel %vm304, %v408, 0
        %419 = vmatpush.bf16.msra.mxu0 0
        %420 = vmatpush.bf16.msra.mxu0 0
        %421 = vmatpush.bf16.msra.mxu0 0
        %422 = vmatpush.bf16.msra.mxu0 %v417
        %423 = vmatpush.bf16.msra.mxu0 %v407
        %424 = vmatpush.bf16.msra.mxu0 %v406
        %425 = vmatpush.bf16.msra.mxu0 %v405
        %426 = vmatpush.bf16.msra.mxu0 %v404
        %427 = vmatmul.bf16.gmra.mxu0 %v414
        %v428 = vpop.f32.mrf.mxu0
        %v429 = vadd.f32 0.0, %v428
        %v430 = vpop.f32.mrf.mxu0
        %v431 = vadd.f32 0.0, %v430
        %432 = vdwg.mxu0
        %v433 = vadd.f32 %v364, %v429
        %v434 = vadd.f32 %v366, %v431
        %435 = vst [vmem:[%s211] sm:$0xff] %v433
        %436 = vst [vmem:[%s211 + $0x8] sm:$0xff] %v434
        %v437 = vadd.f32 %v433, %v434
        %v438 = vrot.slane %v437, 4
        %v439 = vadd.f32 %v437, %v438
        %v440 = vrot.slane %v439, 2
        %v441 = vadd.f32 %v439, %v440
        %v442 = vrot.slane %v441, 1
        %v443 = vadd.f32 %v441, %v442
        %444 = vst [vmem:[%s217] sm:$0x1] %v443
        %v445 = vmul.f32 %v433, %v433
        %v446 = vmul.f32 %v434, %v434
        %v447 = vadd.f32 %v445, %v446
        %v448 = vrot.slane %v447, 4
        %v449 = vadd.f32 %v447, %v448
        %v450 = vrot.slane %v449, 2
        %v451 = vadd.f32 %v449, %v450
        %v452 = vrot.slane %v451, 1
        %v453 = vadd.f32 %v451, %v452
        %454 = vst [vmem:[%s223] sm:$0x1] %v453
        %s455 = sand.u32 %s78, 1
        %s456 = scalar_lea.sflag [#allocation4], %s455
        %s457 = sand.u32 %s78, 1
        %s458 = smul.addr %s457, 16
        %s459 = scalar_lea.vmem [#allocation5], %s458
        %s460 = sand.u32 %s23, 1
        %s461 = scalar_lea.sflag [#allocation7], %s460
        %s462 = sand.u32 %s104, 1
        %s463 = scalar_lea.vmem [#allocation6], %s462
        %s464 = sand.u32 %s23, 1
        %s465 = scalar_lea.sflag [#allocation7], %s464
        %s466 = sand.u32 %s130, 1
        %s467 = scalar_lea.vmem [#allocation8], %s466
        // Predicated region
        $region33: #{tpu_custom_call.1} parent=27 // pred_check
          %p468 = pneg %p88
        $region34: #{tpu_custom_call.1} parent=27 // pred_check_branch
          %470 = sbr.rel (%p468) target = $region36
        $region35: #{tpu_custom_call.1} parent=27 // pred_region
          %472 = vsyncadd %s456, 0
          %s473 = smul.addr %s23, 2
          %s474 = smul.addr %s473, 8
          %s475 = scalar_lea.hbm %s2, %s474
          %s476 = sshll.u32 %s459, 4
          %s477 = int_to_ptr.vmem [resolvable:$true] %s476
          %s478 = sshll.u32 %s475, 4
          %s479 = int_to_ptr.hbm [resolvable:$true] %s478
          %484 = dma.vmem_to_hbm [thread:$0]  %s477, 256, %s479, %s456, 128, 128, 8
        $region36: #{tpu_custom_call.1} parent=27 // pred_fallthru
          _
        // Predicated region
        $region37: #{tpu_custom_call.1} parent=27 // pred_check
          %p485 = pneg %p114
        $region38: #{tpu_custom_call.1} parent=27 // pred_check_branch
          %487 = sbr.rel (%p485) target = $region40
        $region39: #{tpu_custom_call.1} parent=27 // pred_region
          %489 = vsyncadd %s461, 0
          %s490 = scalar_lea.hbm %s3, %s23
          %s492 = sshll.u32 %s463, 4
          %s493 = int_to_ptr.vmem [resolvable:$true] %s492
          %s494 = sshll.u32 %s490, 4
          %s495 = int_to_ptr.hbm [resolvable:$true] %s494
          %497 = dma.vmem_to_hbm [thread:$0]  %s493, 16, %s495, %s461
        $region40: #{tpu_custom_call.1} parent=27 // pred_fallthru
          _
        // Predicated region
        $region41: #{tpu_custom_call.1} parent=27 // pred_check
          %p498 = pneg %p140
        $region42: #{tpu_custom_call.1} parent=27 // pred_check_branch
          %500 = sbr.rel (%p498) target = $region44
        $region43: #{tpu_custom_call.1} parent=27 // pred_region
          %502 = vsyncadd %s465, 0
          %s503 = scalar_lea.hbm %s4, %s23
          %s505 = sshll.u32 %s467, 4
          %s506 = int_to_ptr.vmem [resolvable:$true] %s505
          %s507 = sshll.u32 %s503, 4
          %s508 = int_to_ptr.hbm [resolvable:$true] %s507
          %510 = dma.vmem_to_hbm [thread:$0]  %s506, 16, %s508, %s465
        $region44: #{tpu_custom_call.1} parent=27 // pred_fallthru
          _
      $region28: #{tpu_custom_call.1} parent=5 // pred_fallthru
        _
      %p511 = scmp.le.s32.totalorder 2, %s18
      // Predicated region
      $region45: #{tpu_custom_call.1} parent=5 // pred_check
        %p512 = pneg %p511
      $region46: #{tpu_custom_call.1} parent=5 // pred_check_branch
        %514 = sbr.rel (%p512) target = $region48
      $region47: #{tpu_custom_call.1} parent=5 // pred_region
        %s515 = ssub.s32 %s18, 2
        // Predicated region
        $region49: #{tpu_custom_call.1} parent=47 // pred_check
          %p516 = pneg %p94
        $region50: #{tpu_custom_call.1} parent=47 // pred_check_branch
          %518 = sbr.rel (%p516) target = $region52
        $region51: #{tpu_custom_call.1} parent=47 // pred_region
          %s519 = sand.u32 %s79, 1
          %s520 = scalar_lea.sflag [#allocation4], %s519
          %s521 = sand.u32 %s79, 1
          %s522 = smul.addr %s521, 16
          %s523 = scalar_lea.vmem [#allocation5], %s522
          %525 = dma.done %s520, 256
        $region52: #{tpu_custom_call.1} parent=47 // pred_fallthru
          _
        // Predicated region
        $region53: #{tpu_custom_call.1} parent=47 // pred_check
          %p526 = pneg %p120
        $region54: #{tpu_custom_call.1} parent=47 // pred_check_branch
          %528 = sbr.rel (%p526) target = $region56
        $region55: #{tpu_custom_call.1} parent=47 // pred_region
          %s529 = sand.u32 %s24, 1
          %s530 = scalar_lea.sflag [#allocation7], %s529
          %s531 = sand.u32 %s105, 1
          %s532 = scalar_lea.vmem [#allocation6], %s531
          %534 = dma.done %s530, 16
        $region56: #{tpu_custom_call.1} parent=47 // pred_fallthru
          _
        // Predicated region
        $region57: #{tpu_custom_call.1} parent=47 // pred_check
          %p535 = pneg %p146
        $region58: #{tpu_custom_call.1} parent=47 // pred_check_branch
          %537 = sbr.rel (%p535) target = $region60
        $region59: #{tpu_custom_call.1} parent=47 // pred_region
          %s538 = sand.u32 %s24, 1
          %s539 = scalar_lea.sflag [#allocation7], %s538
          %s540 = sand.u32 %s131, 1
          %s541 = scalar_lea.vmem [#allocation8], %s540
          %543 = dma.done %s539, 16
        $region60: #{tpu_custom_call.1} parent=47 // pred_fallthru
          _
      $region48: #{tpu_custom_call.1} parent=5 // pred_fallthru
        _
    $region6: #{tpu_custom_call.1} parent=1 // loop_footer
      %s22 = sadd.s32 1, %s18
    $region7: #{tpu_custom_call.1} parent=1 // loop_footer_branch
      %17 = sbr.rel target = $region3
    $region8: #{tpu_custom_call.1} parent=1 // loop_exit
      _
    %544 = vsyncpa [#allocation3], 1
    %s545 = scalar_lea.sflag [#allocation3], 1
    %546 = vsyncpa %s545, 1
    %547 = vsyncpa [#allocation4], 1
    %s548 = scalar_lea.sflag [#allocation4], 1
    %549 = vsyncpa %s548, 1
    %550 = vsyncpa [#allocation7], 1
    %s551 = scalar_lea.sflag [#allocation7], 1
    %552 = vsyncpa %s551, 1

</llo_original>
